<compile_context>
chip_gen: v5e
topology: v5e:2x2
jax: 0.10.0
libtpu: 0.0.40
codegen_flags: <defaults>
</compile_context>

<pallas_src>
import functools
import math

import jax
import jax.numpy as jnp
from jax.experimental import pallas as pl
from jax.experimental.pallas import tpu as pltpu

VMEM_LIMIT = 48 * 1024 * 1024        # leave headroom on v7x (64 MiB physical VMEM)
_FUSE_SLAB_BYTES = 1 << 20           # fuse when one (C, H*W) slab is <= 1 MiB


# ------------------------------ kernel helpers -------------------------------

def _mlp_gate(avg_col, max_col, w1, w2, tanh_act):
    """Shared MLP + gate on pooled columns.

    avg_col / max_col : (C, 1) f32
    w1                : (C//r, C)   (PyTorch fc1.weight[:, :, 0, 0])
    w2                : (C, C//r)   (PyTorch fc2.weight[:, :, 0, 0])
    fc2 is linear, so fc2(relu(fc1(avg))) + fc2(relu(fc1(max)))
                    == fc2(relu(fc1(avg)) + relu(fc1(max))).
    """
    h = (jnp.maximum(jnp.dot(w1, avg_col, preferred_element_type=jnp.float32), 0.0) +
         jnp.maximum(jnp.dot(w1, max_col, preferred_element_type=jnp.float32), 0.0))
    merged = jnp.dot(w2, h, preferred_element_type=jnp.float32)       # (C, 1)
    if tanh_act:
        return jnp.tanh(merged) + 1.0
    return jax.nn.sigmoid(merged)


# --------------------------- fused single-pass path --------------------------

def _make_fused_kernel(HW, tanh_act):
    inv_hw = 1.0 / float(HW)

    def kernel(x_ref, w1_ref, w2_ref, o_ref):
        x = x_ref[0].astype(jnp.float32)                       # (C, HW)
        avg = jnp.sum(x, axis=-1, keepdims=True) * inv_hw      # (C, 1)
        mx = jnp.max(x, axis=-1, keepdims=True)                # (C, 1)
        mc = _mlp_gate(avg, mx, w1_ref[...], w2_ref[...], tanh_act)
        o_ref[0] = (x * mc).astype(o_ref.dtype)

    return kernel


def _cbam_fused(x3, w1, w2, tanh_act):
    N, C, HW = x3.shape
    return pl.pallas_call(
        _make_fused_kernel(HW, tanh_act),
        out_shape=jax.ShapeDtypeStruct((N, C, HW), x3.dtype),
        grid_spec=pltpu.PrefetchScalarGridSpec(
            num_scalar_prefetch=0,
            grid=(N,),
            in_specs=[
                pl.BlockSpec((1, C, HW), lambda n: (n, 0, 0)),
                pl.BlockSpec(w1.shape, lambda n: (0, 0)),
                pl.BlockSpec(w2.shape, lambda n: (0, 0)),
            ],
            out_specs=pl.BlockSpec((1, C, HW), lambda n: (n, 0, 0)),
        ),
        compiler_params=pltpu.CompilerParams(
            dimension_semantics=("parallel",),
            vmem_limit_bytes=VMEM_LIMIT),
    )(x3, w1, w2)


# ----------------------------- two-pass tiled path ----------------------------

def _make_stats_kernel(HW, tile_hw, tanh_act):
    need_mask = (HW % tile_hw) != 0
    inv_hw = 1.0 / float(HW)

    def kernel(x_ref, w1_ref, w2_ref, mc_ref, sum_acc, max_acc):
        t = pl.program_id(1)

        @pl.when(t == 0)
        def _():
            sum_acc[...] = jnp.zeros_like(sum_acc)
            max_acc[...] = jnp.full_like(max_acc, -jnp.inf)

        xt = x_ref[0].astype(jnp.float32)                      # (C, tile_hw)
        if need_mask:
            lane = jax.lax.broadcasted_iota(jnp.int32, xt.shape, 1)
            valid = (t * tile_hw + lane) < HW
            xs = jnp.where(valid, xt, 0.0)
            xm = jnp.where(valid, xt, -jnp.inf)
        else:
            xs = xt
            xm = xt
        sum_acc[...] += jnp.sum(xs, axis=-1, keepdims=True)
        max_acc[...] = jnp.maximum(max_acc[...], jnp.max(xm, axis=-1, keepdims=True))

        @pl.when(t == pl.num_programs(1) - 1)
        def _():
            avg = sum_acc[...] * inv_hw                        # (C, 1)
            mc_ref[0] = _mlp_gate(avg, max_acc[...], w1_ref[...], w2_ref[...], tanh_act)

    return kernel


def _cbam_stats(x3, w1, w2, tanh_act, tile_hw):
    N, C, HW = x3.shape
    T = pl.cdiv(HW, tile_hw)
    return pl.pallas_call(
        _make_stats_kernel(HW, tile_hw, tanh_act),
        out_shape=jax.ShapeDtypeStruct((N, C, 1), jnp.float32),
        grid_spec=pltpu.PrefetchScalarGridSpec(
            num_scalar_prefetch=0,
            grid=(N, T),
            in_specs=[
                pl.BlockSpec((1, C, tile_hw), lambda n, t: (n, 0, t)),
                pl.BlockSpec(w1.shape, lambda n, t: (0, 0)),
                pl.BlockSpec(w2.shape, lambda n, t: (0, 0)),
            ],
            out_specs=pl.BlockSpec((1, C, 1), lambda n, t: (n, 0, 0)),
            scratch_shapes=[pltpu.VMEM((C, 1), jnp.float32),   # running sum
                            pltpu.VMEM((C, 1), jnp.float32)],  # running max
        ),
        compiler_params=pltpu.CompilerParams(
            dimension_semantics=("parallel", "arbitrary"),
            vmem_limit_bytes=VMEM_LIMIT),
    )(x3, w1, w2)


def _scale_kernel(x_ref, mc_ref, o_ref):
    o_ref[0] = (x_ref[0].astype(jnp.float32) * mc_ref[0]).astype(o_ref.dtype)


def _cbam_scale(x3, mc, tile_hw):
    N, C, HW = x3.shape
    T = pl.cdiv(HW, tile_hw)
    return pl.pallas_call(
        _scale_kernel,
        out_shape=jax.ShapeDtypeStruct((N, C, HW), x3.dtype),
        grid_spec=pltpu.PrefetchScalarGridSpec(
            num_scalar_prefetch=0,
            grid=(N, T),
            in_specs=[
                pl.BlockSpec((1, C, tile_hw), lambda n, t: (n, 0, t)),
                pl.BlockSpec((1, C, 1), lambda n, t: (n, 0, 0)),
            ],
            out_specs=pl.BlockSpec((1, C, tile_hw), lambda n, t: (n, 0, t)),
        ),
        compiler_params=pltpu.CompilerParams(
            dimension_semantics=("parallel", "parallel"),
            vmem_limit_bytes=VMEM_LIMIT),
    )(x3, mc)


# --------------------------------- wrapper ------------------------------------

def _pick_tile(HW):
    if HW <= 1024:
        return HW           # single full-extent tile (no (8,128) constraint)
    return 512              # multiple of 128 -> lane-dense, pipelined tiles


@functools.partial(jax.jit,
                   static_argnames=("tanh_act", "force_two_pass", "tile_hw"))
def cbam_channel_forward(x, w1, w2, *, tanh_act=False,
                         force_two_pass=False, tile_hw=None):
    """x: (N, C, H, W) NCHW (as in the PyTorch module); returns same shape."""
    N, C, H, W = x.shape
    HW = H * W
    x3 = x.reshape(N, C, HW)
    slab_bytes = C * HW * x.dtype.itemsize
    if (not force_two_pass) and slab_bytes <= _FUSE_SLAB_BYTES:
        out3 = _cbam_fused(x3, w1, w2, tanh_act)
    else:
        t = tile_hw if tile_hw is not None else _pick_tile(HW)
        mc = _cbam_stats(x3, w1, w2, tanh_act, t)
        out3 = _cbam_scale(x3, mc, t)
    return out3.reshape(N, C, H, W)


# ------------------------------ pure-JAX reference -----------------------------

def cbam_reference(x, w1, w2, tanh_act):
    avg = jnp.mean(x, axis=(2, 3))                      # (N, C)
    mx = jnp.max(x, axis=(2, 3))                        # (N, C)

    def mlp(v):
        return jnp.maximum(v @ w1.T, 0.0) @ w2.T

    merged = mlp(avg) + mlp(mx)
    mc = (jnp.tanh(merged) + 1.0) if tanh_act else jax.nn.sigmoid(merged)
    return x * mc[:, :, None, None]


# ----------------------------------- main --------------------------------------

if __name__ == "__main__":
    key = jax.random.PRNGKey(0)
    kx1, kw1, kw2, kx2, kw3, kw4 = jax.random.split(key, 6)

    # ---- case 1: fused single-pass path (sigmoid gate) ----------------------
    N, C, H, W, red = 2, 128, 16, 16, 8
    Cr = C // red
    bound = math.sqrt(6.0 / (C + Cr))                   # xavier_uniform for 1x1 conv
    x = jax.random.normal(kx1, (N, C, H, W), jnp.float32)
    w1 = jax.random.uniform(kw1, (Cr, C), jnp.float32, -bound, bound)   # fc1.weight
    w2 = jax.random.uniform(kw2, (C, Cr), jnp.float32, -bound, bound)   # fc2.weight

    out = jax.block_until_ready(cbam_channel_forward(x, w1, w2, tanh_act=False))
    ref = cbam_reference(x, w1, w2, False)
    assert out.shape == x.shape, out.shape
    assert bool(jnp.all(jnp.isfinite(out)))
    assert bool(jnp.allclose(out, ref, atol=1e-4, rtol=1e-4)), \
        float(jnp.max(jnp.abs(out - ref)))

    # ---- case 2: two-pass tiled path, masked partial last tile (tanh gate) --
    N2, C2, H2, W2, red2 = 2, 64, 40, 40, 8             # H*W = 1600 -> 512,512,512,64
    Cr2 = C2 // red2
    bound2 = math.sqrt(6.0 / (C2 + Cr2))
    x2 = jax.random.normal(kx2, (N2, C2, H2, W2), jnp.float32)
    w1b = jax.random.uniform(kw3, (Cr2, C2), jnp.float32, -bound2, bound2)
    w2b = jax.random.uniform(kw4, (C2, Cr2), jnp.float32, -bound2, bound2)

    out2 = jax.block_until_ready(
        cbam_channel_forward(x2, w1b, w2b, tanh_act=True,
                             force_two_pass=True, tile_hw=512))
    ref2 = cbam_reference(x2, w1b, w2b, True)
    assert out2.shape == x2.shape, out2.shape
    assert bool(jnp.all(jnp.isfinite(out2)))
    assert bool(jnp.allclose(out2, ref2, atol=1e-4, rtol=1e-4)), \
        float(jnp.max(jnp.abs(out2 - ref2)))

    print("KERNEL_OK")
</pallas_src>

<mosaic_0001>
module attributes {stable_mosaic.version = 11 : i64} {
  func.func @kernel(%arg0: i32, %arg1: memref<1x128x256xf32, #tpu.memory_space<vmem>>, %arg2: memref<16x128xf32, #tpu.memory_space<vmem>>, %arg3: memref<128x16xf32, #tpu.memory_space<vmem>>, %arg4: memref<1x128x256xf32, #tpu.memory_space<vmem>>) attributes {dimension_semantics = [#tpu.dimension_semantics<parallel>], iteration_bounds = array<i64: 2>, scalar_prefetch = 0 : i64, scratch_operands = 0 : i64, tpu.core_type = #tpu.core_type<tc>, window_params = [{transform_indices = @transform_0, window_bounds = array<i64: 1, 128, 256>}, {pipeline_mode = #tpu.pipeline_mode<synchronous>, transform_indices = @transform_1, window_bounds = array<i64: 16, 128>}, {pipeline_mode = #tpu.pipeline_mode<synchronous>, transform_indices = @transform_2, window_bounds = array<i64: 128, 16>}, {transform_indices = @transform_3, window_bounds = array<i64: 1, 128, 256>}]} {
    %c0 = arith.constant 0 : index
    %c0_0 = arith.constant 0 : index
    %c0_1 = arith.constant 0 : index
    %0 = vector.load %arg1[%c0, %c0_0, %c0_1] : memref<1x128x256xf32, #tpu.memory_space<vmem>>, vector<1x128x256xf32>
    %1 = vector.shape_cast %0 : vector<1x128x256xf32> to vector<128x256xf32>
    %cst = arith.constant dense<0.000000e+00> : vector<128xf32>
    %2 = vector.multi_reduction <add>, %1, %cst [1] : vector<128x256xf32> to vector<128xf32>
    %3 = vector.shape_cast %2 : vector<128xf32> to vector<128x1xf32>
    %cst_2 = arith.constant 3.906250e-03 : f32
    %4 = vector.broadcast %cst_2 : f32 to vector<128x1xf32>
    %5 = arith.mulf %3, %4 : vector<128x1xf32>
    %cst_3 = arith.constant dense<0xFF800000> : vector<128xf32>
    %6 = vector.multi_reduction <maximumf>, %1, %cst_3 [1] : vector<128x256xf32> to vector<128xf32>
    %7 = vector.shape_cast %6 : vector<128xf32> to vector<128x1xf32>
    %c0_4 = arith.constant 0 : index
    %c0_5 = arith.constant 0 : index
    %8 = vector.load %arg2[%c0_4, %c0_5] : memref<16x128xf32, #tpu.memory_space<vmem>>, vector<16x128xf32>
    %c0_6 = arith.constant 0 : index
    %c0_7 = arith.constant 0 : index
    %9 = vector.load %arg3[%c0_6, %c0_7] : memref<128x16xf32, #tpu.memory_space<vmem>>, vector<128x16xf32>
    %cst_8 = arith.constant dense<0.000000e+00> : vector<16x1xf32>
    %10 = tpu.matmul %8, %5, %cst_8 {dimension_numbers = #tpu.dot_dimension_numbers<[1], [0], [0], [1], [0, 0, 1, 1], [], []>} : vector<16x128xf32>, vector<128x1xf32>, vector<16x1xf32> -> vector<16x1xf32>
    %cst_9 = arith.constant 0.000000e+00 : f32
    %11 = vector.broadcast %cst_9 : f32 to vector<16x1xf32>
    %12 = arith.maximumf %10, %11 : vector<16x1xf32>
    %cst_10 = arith.constant dense<0.000000e+00> : vector<16x1xf32>
    %13 = tpu.matmul %8, %7, %cst_10 {dimension_numbers = #tpu.dot_dimension_numbers<[1], [0], [0], [1], [0, 0, 1, 1], [], []>} : vector<16x128xf32>, vector<128x1xf32>, vector<16x1xf32> -> vector<16x1xf32>
    %cst_11 = arith.constant 0.000000e+00 : f32
    %14 = vector.broadcast %cst_11 : f32 to vector<16x1xf32>
    %15 = arith.maximumf %13, %14 : vector<16x1xf32>
    %16 = arith.addf %12, %15 : vector<16x1xf32>
    %cst_12 = arith.constant dense<0.000000e+00> : vector<128x1xf32>
    %17 = tpu.matmul %9, %16, %cst_12 {dimension_numbers = #tpu.dot_dimension_numbers<[1], [0], [0], [1], [0, 0, 1, 1], [], []>} : vector<128x16xf32>, vector<16x1xf32>, vector<128x1xf32> -> vector<128x1xf32>
    %18 = arith.negf %17 : vector<128x1xf32>
    %19 = math.exp %18 : vector<128x1xf32>
    %cst_13 = arith.constant 1.000000e+00 : f32
    %20 = vector.broadcast %cst_13 : f32 to vector<128x1xf32>
    %21 = arith.addf %20, %19 : vector<128x1xf32>
    %22 = arith.divf %20, %21 : vector<128x1xf32>
    %23 = vector.broadcast %22 : vector<128x1xf32> to vector<128x256xf32>
    %24 = arith.mulf %1, %23 : vector<128x256xf32>
    %c0_14 = arith.constant 0 : index
    %c0_15 = arith.constant 0 : index
    %c0_16 = arith.constant 0 : index
    %25 = vector.load %arg4[%c0_14, %c0_15, %c0_16] : memref<1x128x256xf32, #tpu.memory_space<vmem>>, vector<1x128x256xf32>
    %26 = vector.shape_cast %25 : vector<1x128x256xf32> to vector<128x256xf32>
    %27 = vector.shape_cast %24 : vector<128x256xf32> to vector<1x128x256xf32>
    tpu.vector_store %arg4[%c0_14, %c0_15, %c0_16], %27 {strides = array<i32>} : memref<1x128x256xf32, #tpu.memory_space<vmem>>, vector<1x128x256xf32>,
    return
  }
  func.func @transform_0(%arg0: i32) -> (i32, i32, i32) {
    %c0_i32 = arith.constant 0 : i32
    %c0_i32_0 = arith.constant 0 : i32
    %c0_i32_1 = arith.constant 0 : i32
    return %arg0, %c0_i32, %c0_i32_0 : i32, i32, i32
  }
  func.func @transform_1(%arg0: i32) -> (i32, i32) {
    %c0_i32 = arith.constant 0 : i32
    %c0_i32_0 = arith.constant 0 : i32
    %c0_i32_1 = arith.constant 0 : i32
    return %c0_i32, %c0_i32_0 : i32, i32
  }
  func.func @transform_2(%arg0: i32) -> (i32, i32) {
    %c0_i32 = arith.constant 0 : i32
    %c0_i32_0 = arith.constant 0 : i32
    %c0_i32_1 = arith.constant 0 : i32
    return %c0_i32, %c0_i32_0 : i32, i32
  }
  func.func @transform_3(%arg0: i32) -> (i32, i32, i32) {
    %c0_i32 = arith.constant 0 : i32
    %c0_i32_0 = arith.constant 0 : i32
    %c0_i32_1 = arith.constant 0 : i32
    return %arg0, %c0_i32, %c0_i32_0 : i32, i32, i32
  }
}

</mosaic_0001>

<llo_original>
// kernel: cbam_channel_forward.1
$region0: #{cbam_channel_forward.1}
  #allocation0 [shape = 'u32[]', space=smem, size = 0x4, offset = 0x4, fixed_abs, tag = 'smem constant byte address 0x4 - core index']
  #allocation1 [shape = 'u32[72,128]{1,0:T(1,128)}', space=vmem, size = 0x9000, scoped, tag = 'internal scratch']
  %s0 = inlined_call_operand.vmem [shape: f32[2,128,256], index: 0, kind: input, shape index: {}]
  %s1 = inlined_call_operand.vmem [shape: f32[16,128], index: 1, kind: input, shape index: {}]
  %s2 = inlined_call_operand.vmem [shape: f32[128,16], index: 2, kind: input, shape index: {}]
  %s3 = inlined_call_operand.vmem [shape: f32[2,128,256], index: 3, kind: output, shape index: {}]
  %s4 = sld [smem:[#allocation0]]
  $region45: #{cbam_channel_forward.1} parent=0
    _
  %s6 = ssub.s32 1, %s4
  %s7 = scalar_select 0, %s6, %s4
  loop: start=0, step=1, limit=4
  $region2: #{cbam_channel_forward.1} parent=0 // loop_pre_header
    _
  $region3: #{cbam_channel_forward.1} parent=0 // loop_header
    %s9 = sphi 0, %s13
    %p10 = scmp.ge.s32.totalorder %s9, 4
    %s19 = sphi 0, %s21
    %s22 = sphi 0, %s19
    %s23 = sphi 0, %s22
    %s39 = sphi 0, %s23
    %s43 = sphi 0, %s43
    %s45 = sphi 0, %s43
    %s46 = sphi 0, %s45
    %s60 = sphi 0, %s46
    %s64 = sphi 0, %s64
    %s66 = sphi 0, %s64
    %s67 = sphi 0, %s66
    %s81 = sphi 0, %s67
    %s87 = sphi 0, %s89
    %s90 = sphi 0, %s87
    %s91 = sphi 0, %s90
    %s107 = sphi 0, %s91
  $region4: #{cbam_channel_forward.1} parent=0 // loop_header_branch
    %12 = sbr.rel (%p10) target = $region8
  $region5: #{cbam_channel_forward.1} parent=0 // loop_body
    %s14 = ssub.s32 %s9, 1
    %s15 = ssub.s32 %s9, 2
    %s16 = sadd.s32 %s9, 1
    %s17 = ssub.s32 %s9, %s16
    %p18 = scmp.eq.s32.totalorder %s17, 0
    %s20 = sadd.s32 %s19, 1
    %s21 = scalar_select %p18, %s19, %s20
    %p24 = pneg %p18
    %p25 = scmp.eq.s32.totalorder %s9, 1
    %p26 = por %p24, %p25
    %p27 = scmp.ne.s32.totalorder %s19, %s22
    %p28 = scmp.eq.s32.totalorder %s9, 0
    %p29 = por %p27, %p28
    %p30 = scmp.ne.s32.totalorder %s19, %s22
    %p31 = scmp.eq.s32.totalorder %s14, 1
    %p32 = por %p30, %p31
    %p33 = scmp.ne.s32.totalorder %s22, %s23
    %p34 = scmp.eq.s32.totalorder %s14, 0
    %p35 = por %p33, %p34
    %p36 = scmp.ne.s32.totalorder %s22, %s23
    %p37 = scmp.eq.s32.totalorder %s15, 1
    %p38 = por %p36, %p37
    %p40 = scmp.ne.s32.totalorder %s23, %s39
    %p41 = scmp.eq.s32.totalorder %s15, 0
    %p42 = por %p40, %p41
    %s44 = sadd.s32 %s43, 1
    %p47 = scmp.eq.s32.totalorder %s9, 1
    %p48 = scmp.ne.s32.totalorder %s43, %s45
    %p49 = scmp.eq.s32.totalorder %s9, 0
    %p50 = por %p48, %p49
    %p51 = scmp.ne.s32.totalorder %s43, %s45
    %p52 = scmp.eq.s32.totalorder %s14, 1
    %p53 = por %p51, %p52
    %p54 = scmp.ne.s32.totalorder %s45, %s46
    %p55 = scmp.eq.s32.totalorder %s14, 0
    %p56 = por %p54, %p55
    %p57 = scmp.ne.s32.totalorder %s45, %s46
    %p58 = scmp.eq.s32.totalorder %s15, 1
    %p59 = por %p57, %p58
    %p61 = scmp.ne.s32.totalorder %s46, %s60
    %p62 = scmp.eq.s32.totalorder %s15, 0
    %p63 = por %p61, %p62
    %s65 = sadd.s32 %s64, 1
    %p68 = scmp.eq.s32.totalorder %s9, 1
    %p69 = scmp.ne.s32.totalorder %s64, %s66
    %p70 = scmp.eq.s32.totalorder %s9, 0
    %p71 = por %p69, %p70
    %p72 = scmp.ne.s32.totalorder %s64, %s66
    %p73 = scmp.eq.s32.totalorder %s14, 1
    %p74 = por %p72, %p73
    %p75 = scmp.ne.s32.totalorder %s66, %s67
    %p76 = scmp.eq.s32.totalorder %s14, 0
    %p77 = por %p75, %p76
    %p78 = scmp.ne.s32.totalorder %s66, %s67
    %p79 = scmp.eq.s32.totalorder %s15, 1
    %p80 = por %p78, %p79
    %p82 = scmp.ne.s32.totalorder %s67, %s81
    %p83 = scmp.eq.s32.totalorder %s15, 0
    %p84 = por %p82, %p83
    %s85 = ssub.s32 %s9, %s16
    %p86 = scmp.eq.s32.totalorder %s85, 0
    %s88 = sadd.s32 %s87, 1
    %s89 = scalar_select %p86, %s87, %s88
    %p92 = pneg %p86
    %p93 = scmp.eq.s32.totalorder %s9, 1
    %p94 = por %p92, %p93
    %p95 = scmp.ne.s32.totalorder %s87, %s90
    %p96 = scmp.eq.s32.totalorder %s9, 0
    %p97 = por %p95, %p96
    %p98 = scmp.ne.s32.totalorder %s87, %s90
    %p99 = scmp.eq.s32.totalorder %s14, 1
    %p100 = por %p98, %p99
    %p101 = scmp.ne.s32.totalorder %s90, %s91
    %p102 = scmp.eq.s32.totalorder %s14, 0
    %p103 = por %p101, %p102
    %p104 = scmp.ne.s32.totalorder %s90, %s91
    %p105 = scmp.eq.s32.totalorder %s15, 1
    %p106 = por %p104, %p105
    %p108 = scmp.ne.s32.totalorder %s91, %s107
    %p109 = scmp.eq.s32.totalorder %s15, 0
    %p110 = por %p108, %p109
    %p111 = scmp.le.s32.totalorder 1, %s9
    %p112 = scmp.lt.s32.totalorder %s9, 3
    %p113 = pnand %p111, %p112
    %p114 = pneg %p113
    // Predicated region
    $region9: #{cbam_channel_forward.1} parent=5 // pred_check
      _
    $region10: #{cbam_channel_forward.1} parent=5 // pred_check_branch
      %116 = sbr.rel (%p113) target = $region12
    $region11: #{cbam_channel_forward.1} parent=5 // pred_region
      %s117 = ssub.s32 %s9, 1
      // Predicated region
      $region13: #{cbam_channel_forward.1} parent=11 // pred_check
        %p118 = pneg %p56
      $region14: #{cbam_channel_forward.1} parent=11 // pred_check_branch
        %120 = sbr.rel (%p118) target = $region16
      $region15: #{cbam_channel_forward.1} parent=11 // pred_region
        _
      $region16: #{cbam_channel_forward.1} parent=11 // pred_fallthru
        _
      // Predicated region
      $region17: #{cbam_channel_forward.1} parent=11 // pred_check
        %p121 = pneg %p77
      $region18: #{cbam_channel_forward.1} parent=11 // pred_check_branch
        %123 = sbr.rel (%p121) target = $region20
      $region19: #{cbam_channel_forward.1} parent=11 // pred_region
        _
      $region20: #{cbam_channel_forward.1} parent=11 // pred_fallthru
        _
    $region12: #{cbam_channel_forward.1} parent=5 // pred_fallthru
      _
    %p124 = scmp.lt.s32.totalorder %s9, 2
    // Predicated region
    $region21: #{cbam_channel_forward.1} parent=5 // pred_check
      %p125 = pneg %p124
    $region22: #{cbam_channel_forward.1} parent=5 // pred_check_branch
      %127 = sbr.rel (%p125) target = $region24
    $region23: #{cbam_channel_forward.1} parent=5 // pred_region
      // Predicated region
      $region25: #{cbam_channel_forward.1} parent=23 // pred_check
        %p128 = pneg %p29
      $region26: #{cbam_channel_forward.1} parent=23 // pred_check_branch
        %130 = sbr.rel (%p128) target = $region28
      $region27: #{cbam_channel_forward.1} parent=23 // pred_region
        %p131 = scmp.lt.s32.totalorder %s9, 1
        %s132 = scalar_select %p131, %s9, 1
        %s133 = smul.addr %s132, 32
        %s134 = smul.addr %s133, 8
        %s135 = scalar_lea.vmem %s0, %s134
      $region28: #{cbam_channel_forward.1} parent=23 // pred_fallthru
        _
    $region24: #{cbam_channel_forward.1} parent=5 // pred_fallthru
      _
    %p136 = scmp.le.s32.totalorder 1, %s9
    %p137 = scmp.lt.s32.totalorder %s9, 3
    %p138 = pnand %p136, %p137
    %p139 = pneg %p138
    // Predicated region
    $region29: #{cbam_channel_forward.1} parent=5 // pred_check
      _
    $region30: #{cbam_channel_forward.1} parent=5 // pred_check_branch
      %141 = sbr.rel (%p138) target = $region32
    $region31: #{cbam_channel_forward.1} parent=5 // pred_region
      %s142 = ssub.s32 %s9, 1
      %p143 = scmp.lt.s32.totalorder %s14, 1
      %s144 = scalar_select %p143, %s14, 1
      %s145 = smul.addr %s144, 32
      %s146 = smul.addr %s145, 8
      %s147 = scalar_lea.vmem %s0, %s146
      %p148 = pneg %p35
      %p149 = pneg %p32
      %p150 = pneg %p56
      %p151 = pneg %p53
      %p152 = pneg %p77
      %p153 = pneg %p74
      %p154 = pneg %p103
      %p155 = pneg %p100
      %p156 = scmp.lt.s32.totalorder %s14, 1
      %s157 = scalar_select %p156, %s14, 1
      %s158 = smul.addr %s157, 32
      %s159 = smul.addr %s158, 8
      %s160 = scalar_lea.vmem %s3, %s159
      %p161 = scmp.lt.s32.totalorder %s14, 1
      %s162 = scalar_select %p161, %s14, 1
      %s163 = smul.addr %s162, 32
      %s164 = smul.addr %s163, 8
      %s165 = scalar_lea.vmem %s0, %s164
      %p166 = scmp.lt.s32.totalorder %s14, 1
      %s167 = scalar_select %p166, %s14, 1
      %s168 = smul.addr %s167, 32
      %s169 = smul.addr %s168, 8
      %s170 = scalar_lea.vmem %s3, %s169
      %v171 = vld [vmem:[%s165] sm:$0xff]
      %v172 = vld [vmem:[%s165 + $0x8] sm:$0xff]
      %v173 = vld [vmem:[%s165 + $0x10] sm:$0xff]
      %v174 = vld [vmem:[%s165 + $0x18] sm:$0xff]
      %v175 = vld [vmem:[%s165 + $0x20] sm:$0xff]
      %v176 = vld [vmem:[%s165 + $0x28] sm:$0xff]
      %v177 = vld [vmem:[%s165 + $0x30] sm:$0xff]
      %v178 = vld [vmem:[%s165 + $0x38] sm:$0xff]
      %v179 = vld [vmem:[%s165 + $0x40] sm:$0xff]
      %v180 = vld [vmem:[%s165 + $0x48] sm:$0xff]
      %v181 = vld [vmem:[%s165 + $0x50] sm:$0xff]
      %v182 = vld [vmem:[%s165 + $0x58] sm:$0xff]
      %v183 = vld [vmem:[%s165 + $0x60] sm:$0xff]
      %v184 = vld [vmem:[%s165 + $0x68] sm:$0xff]
      %v185 = vld [vmem:[%s165 + $0x70] sm:$0xff]
      %v186 = vld [vmem:[%s165 + $0x78] sm:$0xff]
      %v187 = vld [vmem:[%s165 + $0x80] sm:$0xff]
      %v188 = vld [vmem:[%s165 + $0x88] sm:$0xff]
      %v189 = vld [vmem:[%s165 + $0x90] sm:$0xff]
      %v190 = vld [vmem:[%s165 + $0x98] sm:$0xff]
      %v191 = vld [vmem:[%s165 + $0xa0] sm:$0xff]
      %v192 = vld [vmem:[%s165 + $0xa8] sm:$0xff]
      %v193 = vld [vmem:[%s165 + $0xb0] sm:$0xff]
      %v194 = vld [vmem:[%s165 + $0xb8] sm:$0xff]
      %v195 = vld [vmem:[%s165 + $0xc0] sm:$0xff]
      %v196 = vld [vmem:[%s165 + $0xc8] sm:$0xff]
      %v197 = vld [vmem:[%s165 + $0xd0] sm:$0xff]
      %v198 = vld [vmem:[%s165 + $0xd8] sm:$0xff]
      %v199 = vld [vmem:[%s165 + $0xe0] sm:$0xff]
      %v200 = vld [vmem:[%s165 + $0xe8] sm:$0xff]
      %v201 = vld [vmem:[%s165 + $0xf0] sm:$0xff]
      %v202 = vld [vmem:[%s165 + $0xf8] sm:$0xff]
      %v203 = vadd.f32 %v171, %v172
      %204 = vadd.xlane.f32.xlu0 %v203
      %v205 = vpop.xlane.xlu0 %204
      %v206 = vadd.f32 %v173, %v174
      %207 = vadd.xlane.f32.xlu0 %v206
      %v208 = vpop.xlane.xlu0 %207
      %v209 = vadd.f32 %v175, %v176
      %210 = vadd.xlane.f32.xlu0 %v209
      %v211 = vpop.xlane.xlu0 %210
      %v212 = vadd.f32 %v177, %v178
      %213 = vadd.xlane.f32.xlu0 %v212
      %v214 = vpop.xlane.xlu0 %213
      %v215 = vadd.f32 %v179, %v180
      %216 = vadd.xlane.f32.xlu0 %v215
      %v217 = vpop.xlane.xlu0 %216
      %v218 = vadd.f32 %v181, %v182
      %219 = vadd.xlane.f32.xlu0 %v218
      %v220 = vpop.xlane.xlu0 %219
      %v221 = vadd.f32 %v183, %v184
      %222 = vadd.xlane.f32.xlu0 %v221
      %v223 = vpop.xlane.xlu0 %222
      %v224 = vadd.f32 %v185, %v186
      %225 = vadd.xlane.f32.xlu0 %v224
      %v226 = vpop.xlane.xlu0 %225
      %v227 = vadd.f32 %v187, %v188
      %228 = vadd.xlane.f32.xlu0 %v227
      %v229 = vpop.xlane.xlu0 %228
      %v230 = vadd.f32 %v189, %v190
      %231 = vadd.xlane.f32.xlu0 %v230
      %v232 = vpop.xlane.xlu0 %231
      %v233 = vadd.f32 %v191, %v192
      %234 = vadd.xlane.f32.xlu0 %v233
      %v235 = vpop.xlane.xlu0 %234
      %v236 = vadd.f32 %v193, %v194
      %237 = vadd.xlane.f32.xlu0 %v236
      %v238 = vpop.xlane.xlu0 %237
      %v239 = vadd.f32 %v195, %v196
      %240 = vadd.xlane.f32.xlu0 %v239
      %v241 = vpop.xlane.xlu0 %240
      %v242 = vadd.f32 %v197, %v198
      %243 = vadd.xlane.f32.xlu0 %v242
      %v244 = vpop.xlane.xlu0 %243
      %v245 = vadd.f32 %v199, %v200
      %246 = vadd.xlane.f32.xlu0 %v245
      %v247 = vpop.xlane.xlu0 %246
      %v248 = vadd.f32 %v201, %v202
      %249 = vadd.xlane.f32.xlu0 %v248
      %v250 = vpop.xlane.xlu0 %249
      %v251 = vmul.f32 %v205, 0.00390625
      %v252 = vmul.f32 %v208, 0.00390625
      %v253 = vmul.f32 %v211, 0.00390625
      %v254 = vmul.f32 %v214, 0.00390625
      %v255 = vmul.f32 %v217, 0.00390625
      %v256 = vmul.f32 %v220, 0.00390625
      %v257 = vmul.f32 %v223, 0.00390625
      %v258 = vmul.f32 %v226, 0.00390625
      %v259 = vmul.f32 %v229, 0.00390625
      %v260 = vmul.f32 %v232, 0.00390625
      %v261 = vmul.f32 %v235, 0.00390625
      %v262 = vmul.f32 %v238, 0.00390625
      %v263 = vmul.f32 %v241, 0.00390625
      %v264 = vmul.f32 %v244, 0.00390625
      %v265 = vmul.f32 %v247, 0.00390625
      %v266 = vmul.f32 %v250, 0.00390625
      %v267 = vmax.f32 %v171, %v172
      %268 = vmax.xlane.f32.xlu0 %v267
      %v269 = vpop.xlane.xlu0 %268
      %v270 = vmax.f32 %v173, %v174
      %271 = vmax.xlane.f32.xlu0 %v270
      %v272 = vpop.xlane.xlu0 %271
      %v273 = vmax.f32 %v175, %v176
      %274 = vmax.xlane.f32.xlu0 %v273
      %v275 = vpop.xlane.xlu0 %274
      %v276 = vmax.f32 %v177, %v178
      %277 = vmax.xlane.f32.xlu0 %v276
      %v278 = vpop.xlane.xlu0 %277
      %v279 = vmax.f32 %v179, %v180
      %280 = vmax.xlane.f32.xlu0 %v279
      %v281 = vpop.xlane.xlu0 %280
      %v282 = vmax.f32 %v181, %v182
      %283 = vmax.xlane.f32.xlu0 %v282
      %v284 = vpop.xlane.xlu0 %283
      %v285 = vmax.f32 %v183, %v184
      %286 = vmax.xlane.f32.xlu0 %v285
      %v287 = vpop.xlane.xlu0 %286
      %v288 = vmax.f32 %v185, %v186
      %289 = vmax.xlane.f32.xlu0 %v288
      %v290 = vpop.xlane.xlu0 %289
      %v291 = vmax.f32 %v187, %v188
      %292 = vmax.xlane.f32.xlu0 %v291
      %v293 = vpop.xlane.xlu0 %292
      %v294 = vmax.f32 %v189, %v190
      %295 = vmax.xlane.f32.xlu0 %v294
      %v296 = vpop.xlane.xlu0 %295
      %v297 = vmax.f32 %v191, %v192
      %298 = vmax.xlane.f32.xlu0 %v297
      %v299 = vpop.xlane.xlu0 %298
      %v300 = vmax.f32 %v193, %v194
      %301 = vmax.xlane.f32.xlu0 %v300
      %v302 = vpop.xlane.xlu0 %301
      %v303 = vmax.f32 %v195, %v196
      %304 = vmax.xlane.f32.xlu0 %v303
      %v305 = vpop.xlane.xlu0 %304
      %v306 = vmax.f32 %v197, %v198
      %307 = vmax.xlane.f32.xlu0 %v306
      %v308 = vpop.xlane.xlu0 %307
      %v309 = vmax.f32 %v199, %v200
      %310 = vmax.xlane.f32.xlu0 %v309
      %v311 = vpop.xlane.xlu0 %310
      %v312 = vmax.f32 %v201, %v202
      %313 = vmax.xlane.f32.xlu0 %v312
      %v314 = vpop.xlane.xlu0 %313
      %v315 = vld [vmem:[%s1] sm:$0xff]
      %v316 = vld [vmem:[%s1 + $0x8] sm:$0xff]
      %v317 = vld [vmem:[%s2] sm:$0xff]
      %v318 = vld [vmem:[%s2 + $0x8] sm:$0xff]
      %v319 = vld [vmem:[%s2 + $0x10] sm:$0xff]
      %v320 = vld [vmem:[%s2 + $0x18] sm:$0xff]
      %v321 = vld [vmem:[%s2 + $0x20] sm:$0xff]
      %v322 = vld [vmem:[%s2 + $0x28] sm:$0xff]
      %v323 = vld [vmem:[%s2 + $0x30] sm:$0xff]
      %v324 = vld [vmem:[%s2 + $0x38] sm:$0xff]
      %v325 = vld [vmem:[%s2 + $0x40] sm:$0xff]
      %v326 = vld [vmem:[%s2 + $0x48] sm:$0xff]
      %v327 = vld [vmem:[%s2 + $0x50] sm:$0xff]
      %v328 = vld [vmem:[%s2 + $0x58] sm:$0xff]
      %v329 = vld [vmem:[%s2 + $0x60] sm:$0xff]
      %v330 = vld [vmem:[%s2 + $0x68] sm:$0xff]
      %v331 = vld [vmem:[%s2 + $0x70] sm:$0xff]
      %v332 = vld [vmem:[%s2 + $0x78] sm:$0xff]
      %333 = vmatpush.msra.mxu0 %v266
      %334 = vmatpush.msra.mxu0 %v265
      %335 = vmatpush.msra.mxu0 %v264
      %336 = vmatpush.msra.mxu0 %v263
      %337 = vmatpush.msra.mxu0 %v262
      %338 = vmatpush.msra.mxu0 %v261
      %339 = vmatpush.msra.mxu0 %v260
      %340 = vmatpush.msra.mxu0 %v259
      %341 = vmatpush.msra.mxu0 %v258
      %342 = vmatpush.msra.mxu0 %v257
      %343 = vmatpush.msra.mxu0 %v256
      %344 = vmatpush.msra.mxu0 %v255
      %345 = vmatpush.msra.mxu0 %v254
      %346 = vmatpush.msra.mxu0 %v253
      %347 = vmatpush.msra.mxu0 %v252
      %348 = vmatpush.msra.mxu0 %v251
      %349 = vmatmul.f32.gmra.mxu0 %v315
      %v350 = vpop.f32.mrf.mxu0
      %v351 = vadd.f32 0.0, %v350
      %352 = vmatmul.f32.gmra.mxu0 %v316
      %v353 = vpop.f32.mrf.mxu0
      %v354 = vadd.f32 0.0, %v353
      %355 = vdwg.mxu0
      %v356 = vmax.f32 %v351, 0.0
      %v357 = vmax.f32 %v354, 0.0
      %358 = vmatpush.msra.mxu0 %v314
      %359 = vmatpush.msra.mxu0 %v311
      %360 = vmatpush.msra.mxu0 %v308
      %361 = vmatpush.msra.mxu0 %v305
      %362 = vmatpush.msra.mxu0 %v302
      %363 = vmatpush.msra.mxu0 %v299
      %364 = vmatpush.msra.mxu0 %v296
      %365 = vmatpush.msra.mxu0 %v293
      %366 = vmatpush.msra.mxu0 %v290
      %367 = vmatpush.msra.mxu0 %v287
      %368 = vmatpush.msra.mxu0 %v284
      %369 = vmatpush.msra.mxu0 %v281
      %370 = vmatpush.msra.mxu0 %v278
      %371 = vmatpush.msra.mxu0 %v275
      %372 = vmatpush.msra.mxu0 %v272
      %373 = vmatpush.msra.mxu0 %v269
      %374 = vmatmul.f32.gmra.mxu0 %v315
      %v375 = vpop.f32.mrf.mxu0
      %v376 = vadd.f32 0.0, %v375
      %377 = vmatmul.f32.gmra.mxu0 %v316
      %v378 = vpop.f32.mrf.mxu0
      %v379 = vadd.f32 0.0, %v378
      %380 = vdwg.mxu0
      %v381 = vmax.f32 %v376, 0.0
      %v382 = vmax.f32 %v379, 0.0
      %v383 = vadd.f32 %v356, %v381
      %v384 = vadd.f32 %v357, %v382
      %vm385 = vcmask 130048
      %v387 = vsel %vm385, %v317, 0
      %v390 = vsel %vm385, %v318, 0
      %v393 = vsel %vm385, %v319, 0
      %v396 = vsel %vm385, %v320, 0
      %v399 = vsel %vm385, %v321, 0
      %v402 = vsel %vm385, %v322, 0
      %v405 = vsel %vm385, %v323, 0
      %v408 = vsel %vm385, %v324, 0
      %v411 = vsel %vm385, %v325, 0
      %v414 = vsel %vm385, %v326, 0
      %v417 = vsel %vm385, %v327, 0
      %v420 = vsel %vm385, %v328, 0
      %v423 = vsel %vm385, %v329, 0
      %v426 = vsel %vm385, %v330, 0
      %v429 = vsel %vm385, %v331, 0
      %v432 = vsel %vm385, %v332, 0
      %434 = vmatpush.msra.mxu0 0.0
      %435 = vmatpush.msra.mxu0 0.0
      %436 = vmatpush.msra.mxu0 0.0
      %437 = vmatpush.msra.mxu0 0.0
      %438 = vmatpush.msra.mxu0 0.0
      %439 = vmatpush.msra.mxu0 0.0
      %440 = vmatpush.msra.mxu0 0.0
      %441 = vmatpush.msra.mxu0 0.0
      %442 = vmatpush.msra.mxu0 0.0
      %443 = vmatpush.msra.mxu0 0.0
      %444 = vmatpush.msra.mxu0 0.0
      %445 = vmatpush.msra.mxu0 0.0
      %446 = vmatpush.msra.mxu0 0.0
      %447 = vmatpush.msra.mxu0 0.0
      %448 = vmatpush.msra.mxu0 %v384
      %449 = vmatpush.msra.mxu0 %v383
      %450 = vmatmul.f32.gmra.mxu0 %v387
      %v451 = vpop.f32.mrf.mxu0
      %v452 = vadd.f32 0.0, %v451
      %453 = vmatmul.f32.gmra.mxu0 %v390
      %v454 = vpop.f32.mrf.mxu0
      %v455 = vadd.f32 0.0, %v454
      %456 = vmatmul.f32.gmra.mxu0 %v393
      %v457 = vpop.f32.mrf.mxu0
      %v458 = vadd.f32 0.0, %v457
      %459 = vmatmul.f32.gmra.mxu0 %v396
      %v460 = vpop.f32.mrf.mxu0
      %v461 = vadd.f32 0.0, %v460
      %462 = vmatmul.f32.gmra.mxu0 %v399
      %v463 = vpop.f32.mrf.mxu0
      %v464 = vadd.f32 0.0, %v463
      %465 = vmatmul.f32.gmra.mxu0 %v402
      %v466 = vpop.f32.mrf.mxu0
      %v467 = vadd.f32 0.0, %v466
      %468 = vmatmul.f32.gmra.mxu0 %v405
      %v469 = vpop.f32.mrf.mxu0
      %v470 = vadd.f32 0.0, %v469
      %471 = vmatmul.f32.gmra.mxu0 %v408
      %v472 = vpop.f32.mrf.mxu0
      %v473 = vadd.f32 0.0, %v472
      %474 = vmatmul.f32.gmra.mxu0 %v411
      %v475 = vpop.f32.mrf.mxu0
      %v476 = vadd.f32 0.0, %v475
      %477 = vmatmul.f32.gmra.mxu0 %v414
      %v478 = vpop.f32.mrf.mxu0
      %v479 = vadd.f32 0.0, %v478
      %480 = vmatmul.f32.gmra.mxu0 %v417
      %v481 = vpop.f32.mrf.mxu0
      %v482 = vadd.f32 0.0, %v481
      %483 = vmatmul.f32.gmra.mxu0 %v420
      %v484 = vpop.f32.mrf.mxu0
      %v485 = vadd.f32 0.0, %v484
      %486 = vmatmul.f32.gmra.mxu0 %v423
      %v487 = vpop.f32.mrf.mxu0
      %v488 = vadd.f32 0.0, %v487
      %489 = vmatmul.f32.gmra.mxu0 %v426
      %v490 = vpop.f32.mrf.mxu0
      %v491 = vadd.f32 0.0, %v490
      %492 = vmatmul.f32.gmra.mxu0 %v429
      %v493 = vpop.f32.mrf.mxu0
      %v494 = vadd.f32 0.0, %v493
      %495 = vmatmul.f32.gmra.mxu0 %v432
      %v496 = vpop.f32.mrf.mxu0
      %v497 = vadd.f32 0.0, %v496
      %498 = vdwg.mxu0
      %v499 = vxor.u32 %v452, 2147483648
      %v500 = vxor.u32 %v455, 2147483648
      %v501 = vxor.u32 %v458, 2147483648
      %v502 = vxor.u32 %v461, 2147483648
      %v503 = vxor.u32 %v464, 2147483648
      %v504 = vxor.u32 %v467, 2147483648
      %v505 = vxor.u32 %v470, 2147483648
      %v506 = vxor.u32 %v473, 2147483648
      %v507 = vxor.u32 %v476, 2147483648
      %v508 = vxor.u32 %v479, 2147483648
      %v509 = vxor.u32 %v482, 2147483648
      %v510 = vxor.u32 %v485, 2147483648
      %v511 = vxor.u32 %v488, 2147483648
      %v512 = vxor.u32 %v491, 2147483648
      %v513 = vxor.u32 %v494, 2147483648
      %v514 = vxor.u32 %v497, 2147483648
      %v515 = vmul.f32 %v499, 1.442695
      %v516 = vpow.pop %v515
      %v517 = vmul.f32 %v500, 1.442695
      %v518 = vpow.pop %v517
      %v519 = vmul.f32 %v501, 1.442695
      %v520 = vpow.pop %v519
      %v521 = vmul.f32 %v502, 1.442695
      %v522 = vpow.pop %v521
      %v523 = vmul.f32 %v503, 1.442695
      %v524 = vpow.pop %v523
      %v525 = vmul.f32 %v504, 1.442695
      %v526 = vpow.pop %v525
      %v527 = vmul.f32 %v505, 1.442695
      %v528 = vpow.pop %v527
      %v529 = vmul.f32 %v506, 1.442695
      %v530 = vpow.pop %v529
      %v531 = vmul.f32 %v507, 1.442695
      %v532 = vpow.pop %v531
      %v533 = vmul.f32 %v508, 1.442695
      %v534 = vpow.pop %v533
      %v535 = vmul.f32 %v509, 1.442695
      %v536 = vpow.pop %v535
      %v537 = vmul.f32 %v510, 1.442695
      %v538 = vpow.pop %v537
      %v539 = vmul.f32 %v511, 1.442695
      %v540 = vpow.pop %v539
      %v541 = vmul.f32 %v512, 1.442695
      %v542 = vpow.pop %v541
      %v543 = vmul.f32 %v513, 1.442695
      %v544 = vpow.pop %v543
      %v545 = vmul.f32 %v514, 1.442695
      %v546 = vpow.pop %v545
      %v547 = vadd.f32 %v516, 1.0
      %v548 = vadd.f32 %v518, 1.0
      %v549 = vadd.f32 %v520, 1.0
      %v550 = vadd.f32 %v522, 1.0
      %v551 = vadd.f32 %v524, 1.0
      %v552 = vadd.f32 %v526, 1.0
      %v553 = vadd.f32 %v528, 1.0
      %v554 = vadd.f32 %v530, 1.0
      %v555 = vadd.f32 %v532, 1.0
      %v556 = vadd.f32 %v534, 1.0
      %v557 = vadd.f32 %v536, 1.0
      %v558 = vadd.f32 %v538, 1.0
      %v559 = vadd.f32 %v540, 1.0
      %v560 = vadd.f32 %v542, 1.0
      %v561 = vadd.f32 %v544, 1.0
      %v562 = vadd.f32 %v546, 1.0
      %v563 = vrcp.pop %v547
      %v564 = vmul.f32 %v547, %v563
      %v565 = vsub.f32 1.0, %v564
      %v566 = vmul.f32 %v563, %v565
      %v567 = vadd.f32 %v563, %v566
      %vm568 = vweird.f32 %v547
      %vm569 = vweird.f32 %v563
      %vm570 = vmor %vm568, %vm569
      %v571 = vsel %vm570, %v563, %v567
      %v572 = vand.u32 2147483647, %v547
      %vm573 = vcmp.eq.f32.partialorder %v572, 8.507059e+37
      %v574 = vand.u32 %v547, 2147483648
      %v575 = vor.u32 1.1754944e-38, %v574
      %v576 = vsel %vm573, %v575, %v571
      %v577 = vmul.f32 1.0, %v576
      %v578 = vrcp.pop %v548
      %v579 = vmul.f32 %v548, %v578
      %v580 = vsub.f32 1.0, %v579
      %v581 = vmul.f32 %v578, %v580
      %v582 = vadd.f32 %v578, %v581
      %vm583 = vweird.f32 %v548
      %vm584 = vweird.f32 %v578
      %vm585 = vmor %vm583, %vm584
      %v586 = vsel %vm585, %v578, %v582
      %v587 = vand.u32 2147483647, %v548
      %vm588 = vcmp.eq.f32.partialorder %v587, 8.507059e+37
      %v589 = vand.u32 %v548, 2147483648
      %v590 = vor.u32 1.1754944e-38, %v589
      %v591 = vsel %vm588, %v590, %v586
      %v592 = vmul.f32 1.0, %v591
      %v593 = vrcp.pop %v549
      %v594 = vmul.f32 %v549, %v593
      %v595 = vsub.f32 1.0, %v594
      %v596 = vmul.f32 %v593, %v595
      %v597 = vadd.f32 %v593, %v596
      %vm598 = vweird.f32 %v549
      %vm599 = vweird.f32 %v593
      %vm600 = vmor %vm598, %vm599
      %v601 = vsel %vm600, %v593, %v597
      %v602 = vand.u32 2147483647, %v549
      %vm603 = vcmp.eq.f32.partialorder %v602, 8.507059e+37
      %v604 = vand.u32 %v549, 2147483648
      %v605 = vor.u32 1.1754944e-38, %v604
      %v606 = vsel %vm603, %v605, %v601
      %v607 = vmul.f32 1.0, %v606
      %v608 = vrcp.pop %v550
      %v609 = vmul.f32 %v550, %v608
      %v610 = vsub.f32 1.0, %v609
      %v611 = vmul.f32 %v608, %v610
      %v612 = vadd.f32 %v608, %v611
      %vm613 = vweird.f32 %v550
      %vm614 = vweird.f32 %v608
      %vm615 = vmor %vm613, %vm614
      %v616 = vsel %vm615, %v608, %v612
      %v617 = vand.u32 2147483647, %v550
      %vm618 = vcmp.eq.f32.partialorder %v617, 8.507059e+37
      %v619 = vand.u32 %v550, 2147483648
      %v620 = vor.u32 1.1754944e-38, %v619
      %v621 = vsel %vm618, %v620, %v616
      %v622 = vmul.f32 1.0, %v621
      %v623 = vrcp.pop %v551
      %v624 = vmul.f32 %v551, %v623
      %v625 = vsub.f32 1.0, %v624
      %v626 = vmul.f32 %v623, %v625
      %v627 = vadd.f32 %v623, %v626
      %vm628 = vweird.f32 %v551
      %vm629 = vweird.f32 %v623
      %vm630 = vmor %vm628, %vm629
      %v631 = vsel %vm630, %v623, %v627
      %v632 = vand.u32 2147483647, %v551
      %vm633 = vcmp.eq.f32.partialorder %v632, 8.507059e+37
      %v634 = vand.u32 %v551, 2147483648
      %v635 = vor.u32 1.1754944e-38, %v634
      %v636 = vsel %vm633, %v635, %v631
      %v637 = vmul.f32 1.0, %v636
      %v638 = vrcp.pop %v552
      %v639 = vmul.f32 %v552, %v638
      %v640 = vsub.f32 1.0, %v639
      %v641 = vmul.f32 %v638, %v640
      %v642 = vadd.f32 %v638, %v641
      %vm643 = vweird.f32 %v552
      %vm644 = vweird.f32 %v638
      %vm645 = vmor %vm643, %vm644
      %v646 = vsel %vm645, %v638, %v642
      %v647 = vand.u32 2147483647, %v552
      %vm648 = vcmp.eq.f32.partialorder %v647, 8.507059e+37
      %v649 = vand.u32 %v552, 2147483648
      %v650 = vor.u32 1.1754944e-38, %v649
      %v651 = vsel %vm648, %v650, %v646
      %v652 = vmul.f32 1.0, %v651
      %v653 = vrcp.pop %v553
      %v654 = vmul.f32 %v553, %v653
      %v655 = vsub.f32 1.0, %v654
      %v656 = vmul.f32 %v653, %v655
      %v657 = vadd.f32 %v653, %v656
      %vm658 = vweird.f32 %v553
      %vm659 = vweird.f32 %v653
      %vm660 = vmor %vm658, %vm659
      %v661 = vsel %vm660, %v653, %v657
      %v662 = vand.u32 2147483647, %v553
      %vm663 = vcmp.eq.f32.partialorder %v662, 8.507059e+37
      %v664 = vand.u32 %v553, 2147483648
      %v665 = vor.u32 1.1754944e-38, %v664
      %v666 = vsel %vm663, %v665, %v661
      %v667 = vmul.f32 1.0, %v666
      %v668 = vrcp.pop %v554
      %v669 = vmul.f32 %v554, %v668
      %v670 = vsub.f32 1.0, %v669
      %v671 = vmul.f32 %v668, %v670
      %v672 = vadd.f32 %v668, %v671
      %vm673 = vweird.f32 %v554
      %vm674 = vweird.f32 %v668
      %vm675 = vmor %vm673, %vm674
      %v676 = vsel %vm675, %v668, %v672
      %v677 = vand.u32 2147483647, %v554
      %vm678 = vcmp.eq.f32.partialorder %v677, 8.507059e+37
      %v679 = vand.u32 %v554, 2147483648
      %v680 = vor.u32 1.1754944e-38, %v679
      %v681 = vsel %vm678, %v680, %v676
      %v682 = vmul.f32 1.0, %v681
      %v683 = vrcp.pop %v555
      %v684 = vmul.f32 %v555, %v683
      %v685 = vsub.f32 1.0, %v684
      %v686 = vmul.f32 %v683, %v685
      %v687 = vadd.f32 %v683, %v686
      %vm688 = vweird.f32 %v555
      %vm689 = vweird.f32 %v683
      %vm690 = vmor %vm688, %vm689
      %v691 = vsel %vm690, %v683, %v687
      %v692 = vand.u32 2147483647, %v555
      %vm693 = vcmp.eq.f32.partialorder %v692, 8.507059e+37
      %v694 = vand.u32 %v555, 2147483648
      %v695 = vor.u32 1.1754944e-38, %v694
      %v696 = vsel %vm693, %v695, %v691
      %v697 = vmul.f32 1.0, %v696
      %v698 = vrcp.pop %v556
      %v699 = vmul.f32 %v556, %v698
      %v700 = vsub.f32 1.0, %v699
      %v701 = vmul.f32 %v698, %v700
      %v702 = vadd.f32 %v698, %v701
      %vm703 = vweird.f32 %v556
      %vm704 = vweird.f32 %v698
      %vm705 = vmor %vm703, %vm704
      %v706 = vsel %vm705, %v698, %v702
      %v707 = vand.u32 2147483647, %v556
      %vm708 = vcmp.eq.f32.partialorder %v707, 8.507059e+37
      %v709 = vand.u32 %v556, 2147483648
      %v710 = vor.u32 1.1754944e-38, %v709
      %v711 = vsel %vm708, %v710, %v706
      %v712 = vmul.f32 1.0, %v711
      %v713 = vrcp.pop %v557
      %v714 = vmul.f32 %v557, %v713
      %v715 = vsub.f32 1.0, %v714
      %v716 = vmul.f32 %v713, %v715
      %v717 = vadd.f32 %v713, %v716
      %vm718 = vweird.f32 %v557
      %vm719 = vweird.f32 %v713
      %vm720 = vmor %vm718, %vm719
      %v721 = vsel %vm720, %v713, %v717
      %v722 = vand.u32 2147483647, %v557
      %vm723 = vcmp.eq.f32.partialorder %v722, 8.507059e+37
      %v724 = vand.u32 %v557, 2147483648
      %v725 = vor.u32 1.1754944e-38, %v724
      %v726 = vsel %vm723, %v725, %v721
      %v727 = vmul.f32 1.0, %v726
      %v728 = vrcp.pop %v558
      %v729 = vmul.f32 %v558, %v728
      %v730 = vsub.f32 1.0, %v729
      %v731 = vmul.f32 %v728, %v730
      %v732 = vadd.f32 %v728, %v731
      %vm733 = vweird.f32 %v558
      %vm734 = vweird.f32 %v728
      %vm735 = vmor %vm733, %vm734
      %v736 = vsel %vm735, %v728, %v732
      %v737 = vand.u32 2147483647, %v558
      %vm738 = vcmp.eq.f32.partialorder %v737, 8.507059e+37
      %v739 = vand.u32 %v558, 2147483648
      %v740 = vor.u32 1.1754944e-38, %v739
      %v741 = vsel %vm738, %v740, %v736
      %v742 = vmul.f32 1.0, %v741
      %v743 = vrcp.pop %v559
      %v744 = vmul.f32 %v559, %v743
      %v745 = vsub.f32 1.0, %v744
      %v746 = vmul.f32 %v743, %v745
      %v747 = vadd.f32 %v743, %v746
      %vm748 = vweird.f32 %v559
      %vm749 = vweird.f32 %v743
      %vm750 = vmor %vm748, %vm749
      %v751 = vsel %vm750, %v743, %v747
      %v752 = vand.u32 2147483647, %v559
      %vm753 = vcmp.eq.f32.partialorder %v752, 8.507059e+37
      %v754 = vand.u32 %v559, 2147483648
      %v755 = vor.u32 1.1754944e-38, %v754
      %v756 = vsel %vm753, %v755, %v751
      %v757 = vmul.f32 1.0, %v756
      %v758 = vrcp.pop %v560
      %v759 = vmul.f32 %v560, %v758
      %v760 = vsub.f32 1.0, %v759
      %v761 = vmul.f32 %v758, %v760
      %v762 = vadd.f32 %v758, %v761
      %vm763 = vweird.f32 %v560
      %vm764 = vweird.f32 %v758
      %vm765 = vmor %vm763, %vm764
      %v766 = vsel %vm765, %v758, %v762
      %v767 = vand.u32 2147483647, %v560
      %vm768 = vcmp.eq.f32.partialorder %v767, 8.507059e+37
      %v769 = vand.u32 %v560, 2147483648
      %v770 = vor.u32 1.1754944e-38, %v769
      %v771 = vsel %vm768, %v770, %v766
      %v772 = vmul.f32 1.0, %v771
      %v773 = vrcp.pop %v561
      %v774 = vmul.f32 %v561, %v773
      %v775 = vsub.f32 1.0, %v774
      %v776 = vmul.f32 %v773, %v775
      %v777 = vadd.f32 %v773, %v776
      %vm778 = vweird.f32 %v561
      %vm779 = vweird.f32 %v773
      %vm780 = vmor %vm778, %vm779
      %v781 = vsel %vm780, %v773, %v777
      %v782 = vand.u32 2147483647, %v561
      %vm783 = vcmp.eq.f32.partialorder %v782, 8.507059e+37
      %v784 = vand.u32 %v561, 2147483648
      %v785 = vor.u32 1.1754944e-38, %v784
      %v786 = vsel %vm783, %v785, %v781
      %v787 = vmul.f32 1.0, %v786
      %v788 = vrcp.pop %v562
      %v789 = vmul.f32 %v562, %v788
      %v790 = vsub.f32 1.0, %v789
      %v791 = vmul.f32 %v788, %v790
      %v792 = vadd.f32 %v788, %v791
      %vm793 = vweird.f32 %v562
      %vm794 = vweird.f32 %v788
      %vm795 = vmor %vm793, %vm794
      %v796 = vsel %vm795, %v788, %v792
      %v797 = vand.u32 2147483647, %v562
      %vm798 = vcmp.eq.f32.partialorder %v797, 8.507059e+37
      %v799 = vand.u32 %v562, 2147483648
      %v800 = vor.u32 1.1754944e-38, %v799
      %v801 = vsel %vm798, %v800, %v796
      %v802 = vmul.f32 1.0, %v801
      %804 = vset.pattern.permute.xlu0 0
      %805 = vperm.xlu0 %804, %v577
      %v806 = vpop.permute.xlu0 %805
      %809 = vset.pattern.permute.xlu0 0
      %810 = vperm.xlu0 %809, %v592
      %v811 = vpop.permute.xlu0 %810
      %814 = vset.pattern.permute.xlu0 0
      %815 = vperm.xlu0 %814, %v607
      %v816 = vpop.permute.xlu0 %815
      %819 = vset.pattern.permute.xlu0 0
      %820 = vperm.xlu0 %819, %v622
      %v821 = vpop.permute.xlu0 %820
      %824 = vset.pattern.permute.xlu0 0
      %825 = vperm.xlu0 %824, %v637
      %v826 = vpop.permute.xlu0 %825
      %829 = vset.pattern.permute.xlu0 0
      %830 = vperm.xlu0 %829, %v652
      %v831 = vpop.permute.xlu0 %830
      %834 = vset.pattern.permute.xlu0 0
      %835 = vperm.xlu0 %834, %v667
      %v836 = vpop.permute.xlu0 %835
      %839 = vset.pattern.permute.xlu0 0
      %840 = vperm.xlu0 %839, %v682
      %v841 = vpop.permute.xlu0 %840
      %844 = vset.pattern.permute.xlu0 0
      %845 = vperm.xlu0 %844, %v697
      %v846 = vpop.permute.xlu0 %845
      %849 = vset.pattern.permute.xlu0 0
      %850 = vperm.xlu0 %849, %v712
      %v851 = vpop.permute.xlu0 %850
      %854 = vset.pattern.permute.xlu0 0
      %855 = vperm.xlu0 %854, %v727
      %v856 = vpop.permute.xlu0 %855
      %859 = vset.pattern.permute.xlu0 0
      %860 = vperm.xlu0 %859, %v742
      %v861 = vpop.permute.xlu0 %860
      %864 = vset.pattern.permute.xlu0 0
      %865 = vperm.xlu0 %864, %v757
      %v866 = vpop.permute.xlu0 %865
      %869 = vset.pattern.permute.xlu0 0
      %870 = vperm.xlu0 %869, %v772
      %v871 = vpop.permute.xlu0 %870
      %874 = vset.pattern.permute.xlu0 0
      %875 = vperm.xlu0 %874, %v787
      %v876 = vpop.permute.xlu0 %875
      %879 = vset.pattern.permute.xlu0 0
      %880 = vperm.xlu0 %879, %v802
      %v881 = vpop.permute.xlu0 %880
      %v883 = vmul.f32 %v171, %v806
      %v884 = vmul.f32 %v172, %v806
      %v885 = vmul.f32 %v173, %v811
      %v886 = vmul.f32 %v174, %v811
      %v887 = vmul.f32 %v175, %v816
      %v888 = vmul.f32 %v176, %v816
      %v889 = vmul.f32 %v177, %v821
      %v890 = vmul.f32 %v178, %v821
      %v891 = vmul.f32 %v179, %v826
      %v892 = vmul.f32 %v180, %v826
      %v893 = vmul.f32 %v181, %v831
      %v894 = vmul.f32 %v182, %v831
      %v895 = vmul.f32 %v183, %v836
      %v896 = vmul.f32 %v184, %v836
      %v897 = vmul.f32 %v185, %v841
      %v898 = vmul.f32 %v186, %v841
      %v899 = vmul.f32 %v187, %v846
      %v900 = vmul.f32 %v188, %v846
      %v901 = vmul.f32 %v189, %v851
      %v902 = vmul.f32 %v190, %v851
      %v903 = vmul.f32 %v191, %v856
      %v904 = vmul.f32 %v192, %v856
      %v905 = vmul.f32 %v193, %v861
      %v906 = vmul.f32 %v194, %v861
      %v907 = vmul.f32 %v195, %v866
      %v908 = vmul.f32 %v196, %v866
      %v909 = vmul.f32 %v197, %v871
      %v910 = vmul.f32 %v198, %v871
      %v911 = vmul.f32 %v199, %v876
      %v912 = vmul.f32 %v200, %v876
      %v913 = vmul.f32 %v201, %v881
      %v914 = vmul.f32 %v202, %v881
      %915 = vst [vmem:[%s170] sm:$0xff] %v883
      %916 = vst [vmem:[%s170 + $0x8] sm:$0xff] %v884
      %917 = vst [vmem:[%s170 + $0x10] sm:$0xff] %v885
      %918 = vst [vmem:[%s170 + $0x18] sm:$0xff] %v886
      %919 = vst [vmem:[%s170 + $0x20] sm:$0xff] %v887
      %920 = vst [vmem:[%s170 + $0x28] sm:$0xff] %v888
      %921 = vst [vmem:[%s170 + $0x30] sm:$0xff] %v889
      %922 = vst [vmem:[%s170 + $0x38] sm:$0xff] %v890
      %923 = vst [vmem:[%s170 + $0x40] sm:$0xff] %v891
      %924 = vst [vmem:[%s170 + $0x48] sm:$0xff] %v892
      %925 = vst [vmem:[%s170 + $0x50] sm:$0xff] %v893
      %926 = vst [vmem:[%s170 + $0x58] sm:$0xff] %v894
      %927 = vst [vmem:[%s170 + $0x60] sm:$0xff] %v895
      %928 = vst [vmem:[%s170 + $0x68] sm:$0xff] %v896
      %929 = vst [vmem:[%s170 + $0x70] sm:$0xff] %v897
      %930 = vst [vmem:[%s170 + $0x78] sm:$0xff] %v898
      %931 = vst [vmem:[%s170 + $0x80] sm:$0xff] %v899
      %932 = vst [vmem:[%s170 + $0x88] sm:$0xff] %v900
      %933 = vst [vmem:[%s170 + $0x90] sm:$0xff] %v901
      %934 = vst [vmem:[%s170 + $0x98] sm:$0xff] %v902
      %935 = vst [vmem:[%s170 + $0xa0] sm:$0xff] %v903
      %936 = vst [vmem:[%s170 + $0xa8] sm:$0xff] %v904
      %937 = vst [vmem:[%s170 + $0xb0] sm:$0xff] %v905
      %938 = vst [vmem:[%s170 + $0xb8] sm:$0xff] %v906
      %939 = vst [vmem:[%s170 + $0xc0] sm:$0xff] %v907
      %940 = vst [vmem:[%s170 + $0xc8] sm:$0xff] %v908
      %941 = vst [vmem:[%s170 + $0xd0] sm:$0xff] %v909
      %942 = vst [vmem:[%s170 + $0xd8] sm:$0xff] %v910
      %943 = vst [vmem:[%s170 + $0xe0] sm:$0xff] %v911
      %944 = vst [vmem:[%s170 + $0xe8] sm:$0xff] %v912
      %945 = vst [vmem:[%s170 + $0xf0] sm:$0xff] %v913
      %946 = vst [vmem:[%s170 + $0xf8] sm:$0xff] %v914
      %p947 = scmp.lt.s32.totalorder %s14, 1
      %s948 = scalar_select %p947, %s14, 1
      %s949 = smul.addr %s948, 32
      %s950 = smul.addr %s949, 8
      %s951 = scalar_lea.vmem %s3, %s950
      // Predicated region
      $region33: #{cbam_channel_forward.1} parent=31 // pred_check
        %p952 = pneg %p100
      $region34: #{cbam_channel_forward.1} parent=31 // pred_check_branch
        %954 = sbr.rel (%p952) target = $region36
      $region35: #{cbam_channel_forward.1} parent=31 // pred_region
        _
      $region36: #{cbam_channel_forward.1} parent=31 // pred_fallthru
        _
    $region32: #{cbam_channel_forward.1} parent=5 // pred_fallthru
      _
    %p955 = scmp.le.s32.totalorder 2, %s9
    // Predicated region
    $region37: #{cbam_channel_forward.1} parent=5 // pred_check
      %p956 = pneg %p955
    $region38: #{cbam_channel_forward.1} parent=5 // pred_check_branch
      %958 = sbr.rel (%p956) target = $region40
    $region39: #{cbam_channel_forward.1} parent=5 // pred_region
      %s959 = ssub.s32 %s9, 2
      // Predicated region
      $region41: #{cbam_channel_forward.1} parent=39 // pred_check
        %p960 = pneg %p106
      $region42: #{cbam_channel_forward.1} parent=39 // pred_check_branch
        %962 = sbr.rel (%p960) target = $region44
      $region43: #{cbam_channel_forward.1} parent=39 // pred_region
        %p963 = scmp.lt.s32.totalorder %s15, 1
        %s964 = scalar_select %p963, %s15, 1
        %s965 = smul.addr %s964, 32
        %s966 = smul.addr %s965, 8
        %s967 = scalar_lea.vmem %s3, %s966
      $region44: #{cbam_channel_forward.1} parent=39 // pred_fallthru
        _
    $region40: #{cbam_channel_forward.1} parent=5 // pred_fallthru
      _
  $region6: #{cbam_channel_forward.1} parent=0 // loop_footer
    %s13 = sadd.s32 1, %s9
  $region7: #{cbam_channel_forward.1} parent=0 // loop_footer_branch
    %8 = sbr.rel target = $region3
  $region8: #{cbam_channel_forward.1} parent=0 // loop_exit
    _

</llo_original>
